<compile_context>
chip_gen: v6e
topology: v6e:2x2x1
jax: 0.10.0
libtpu: 0.0.40
codegen_flags: <defaults>
</compile_context>

<pallas_src>
import functools

import jax
import jax.numpy as jnp
from jax.experimental import pallas as pl
from jax.experimental.pallas import tpu as pltpu


def _round_up(x, m):
    return (x + m - 1) // m * m


def _tpu_tile_defaults():
    """Per-generation (block_m, block_n, block_k, vmem_limit) defaults."""
    try:
        kind = jax.devices()[0].device_kind.lower()
    except Exception:  # pragma: no cover - CPU/interpret fallback
        kind = ""
    if "7" in kind:                     # v7x: 64 MiB VMEM/TC, 3.2 TB/s HBM
        return dict(bm=512, bn=1024, bk=512, vmem=48 * 1024 * 1024)
    if "v6" in kind:                    # v6e: highest TF/s-to-BW ratio
        return dict(bm=1024, bn=1536, bk=512, vmem=96 * 1024 * 1024)
    if "v5" in kind:                    # v5e: ~240 flops/byte break-even
        return dict(bm=512, bn=512, bk=512, vmem=64 * 1024 * 1024)
    return dict(bm=512, bn=512, bk=512, vmem=64 * 1024 * 1024)


def _fc_kernel(x_ref, w_ref, b_ref, a_ref, o_ref):
    """out = act(x @ w + b); act(y) = where(y >= 0, y, alpha * y).

    alpha == 0 -> ReLU, alpha == 1 -> identity, learned alpha -> PReLU.
    The output tile is the accumulator (resident across the K grid axis).
    """
    k = pl.program_id(2)

    @pl.when(k == 0)
    def _():
        o_ref[...] = jnp.zeros_like(o_ref)

    # MXU: bf16 x bf16 -> fp32 accumulate directly into the output tile.
    o_ref[...] += jnp.dot(
        x_ref[...], w_ref[...], preferred_element_type=jnp.float32
    )

    # Epilogue: bias + activation exactly once per output tile.
    @pl.when(k == pl.num_programs(2) - 1)
    def _():
        out = o_ref[...] + b_ref[...]                 # (1, tn) broadcasts
        o_ref[...] = jnp.where(out >= 0.0, out, out * a_ref[...])


@functools.partial(
    jax.jit, static_argnames=("tm", "tn", "tk", "vmem_limit_bytes")
)
def _fc_pallas(xp, wp, bp, ap, *, tm, tn, tk, vmem_limit_bytes):
    Mp, Kp = xp.shape
    _, Np = wp.shape
    grid = (Mp // tm, Np // tn, Kp // tk)

    cost = pl.CostEstimate(
        flops=2 * Mp * Np * Kp,
        bytes_accessed=Mp * Kp * 2 + Kp * Np * 2 + Mp * Np * 4 + 2 * Np * 4,
        transcendentals=0,
    )

    return pl.pallas_call(
        _fc_kernel,
        out_shape=jax.ShapeDtypeStruct((Mp, Np), jnp.float32),
        grid_spec=pltpu.PrefetchScalarGridSpec(
            num_scalar_prefetch=0,
            grid=grid,
            in_specs=[
                pl.BlockSpec((tm, tk), lambda i, j, k: (i, k)),   # x tile
                pl.BlockSpec((tk, tn), lambda i, j, k: (k, j)),   # weight tile
                pl.BlockSpec((1, tn), lambda i, j, k: (0, j)),    # bias slice
                pl.BlockSpec((1, tn), lambda i, j, k: (0, j)),    # alpha slice
            ],
            out_specs=pl.BlockSpec((tm, tn), lambda i, j, k: (i, j)),
        ),
        compiler_params=pltpu.CompilerParams(
            dimension_semantics=("parallel", "parallel", "arbitrary"),
            vmem_limit_bytes=vmem_limit_bytes,
        ),
        cost_estimate=cost,
    )(xp, wp, bp, ap)


class FC:
    """Pallas-TPU equivalent of models_mtl.FC: y = act(x @ W.T + b)."""

    def __init__(self, in_features, out_features, NL="relu", *,
                 weight=None, bias=None, prelu_alpha=0.25, key=None,
                 block_m=None, block_n=None, block_k=None,
                 vmem_limit_bytes=None):
        if NL not in ("relu", "prelu", "none", None):
            raise ValueError(f"unsupported NL={NL!r}")
        self.NL = NL
        self.in_features = int(in_features)
        self.out_features = int(out_features)

        d = _tpu_tile_defaults()
        self._bm = int(block_m or d["bm"])
        # Clamp lane-dim tiles for small layers; keep them 128-multiples.
        self._tn = min(int(block_n or d["bn"]), _round_up(out_features, 128))
        self._tk = min(int(block_k or d["bk"]), _round_up(in_features, 128))
        self._vmem = int(vmem_limit_bytes or d["vmem"])

        # PyTorch nn.Linear default init: U(-1/sqrt(in), 1/sqrt(in)).
        if weight is None or bias is None:
            if key is None:
                key = jax.random.PRNGKey(0)
            kw, kb = jax.random.split(key)
            bound = 1.0 / float(in_features) ** 0.5
            if weight is None:
                weight = jax.random.uniform(
                    kw, (out_features, in_features), jnp.float32, -bound, bound)
            if bias is None:
                bias = jax.random.uniform(
                    kb, (out_features,), jnp.float32, -bound, bound)

        Kp = _round_up(self.in_features, self._tk)
        Np = _round_up(self.out_features, self._tn)

        # Hoisted out of the forward path: transpose + bf16 cast + pad, ONCE.
        w_t = jnp.asarray(weight, jnp.float32).T                  # (K, N)
        self.w = jnp.pad(
            w_t.astype(jnp.bfloat16),
            ((0, Kp - self.in_features), (0, Np - self.out_features)))
        self.b = jnp.pad(
            jnp.asarray(bias, jnp.float32),
            (0, Np - self.out_features)).reshape(1, Np)

        if NL == "relu":
            alpha = jnp.zeros((self.out_features,), jnp.float32)
        elif NL == "prelu":
            # nn.PReLU() default: single learned slope (init 0.25), broadcast
            # per-channel here (covers num_parameters=1 and =out_features).
            alpha = jnp.full((self.out_features,), float(prelu_alpha),
                             jnp.float32)
        else:
            alpha = jnp.ones((self.out_features,), jnp.float32)
        self.alpha = jnp.pad(alpha, (0, Np - self.out_features)).reshape(1, Np)

    def __call__(self, x):
        M, K = x.shape
        assert K == self.in_features
        # bf16 packs 16 rows per sublane-packed vreg -> round the M tile to 16.
        tm = min(self._bm, _round_up(M, 16))
        Mp = _round_up(M, tm)
        Kp = self.w.shape[0]

        xp = x.astype(jnp.bfloat16)
        if Mp != M or Kp != K:
            xp = jnp.pad(xp, ((0, Mp - M), (0, Kp - K)))

        out = _fc_pallas(xp, self.w, self.b, self.alpha,
                         tm=tm, tn=self._tn, tk=self._tk,
                         vmem_limit_bytes=self._vmem)
        return out[:M, :self.out_features].astype(x.dtype)


def fc_reference(x, weight, bias, NL="relu", prelu_alpha=0.25):
    """Reference with the same bf16-operand / fp32-accumulate numerics."""
    xf = x.astype(jnp.bfloat16).astype(jnp.float32)
    wf = jnp.asarray(weight, jnp.float32).astype(jnp.bfloat16).astype(jnp.float32)
    y = xf @ wf.T + jnp.asarray(bias, jnp.float32)
    if NL == "relu":
        y = jnp.maximum(y, 0.0)
    elif NL == "prelu":
        y = jnp.where(y >= 0.0, y, prelu_alpha * y)
    return y.astype(x.dtype)


if __name__ == "__main__":
    # Small shapes consistent with FC(in_features=32, out_features=64), batch=8.
    batch, in_features, out_features = 8, 32, 64

    key = jax.random.PRNGKey(0)
    kx, kw, kb = jax.random.split(key, 3)

    bound = 1.0 / jnp.sqrt(jnp.float32(in_features))
    w_torch = jax.random.uniform(
        kw, (out_features, in_features), jnp.float32, -bound, bound)
    b = jax.random.uniform(kb, (out_features,), jnp.float32, -bound, bound)
    x = jax.random.normal(kx, (batch, in_features), jnp.float32)

    ok = True
    for nl in ("relu", "prelu", "none"):
        fc = FC(in_features, out_features, NL=nl, weight=w_torch, bias=b)
        out = jax.block_until_ready(fc(x))
        ref = fc_reference(x, w_torch, b, NL=nl)
        assert out.shape == (batch, out_features)
        ok = ok and bool(jnp.allclose(out, ref, atol=1e-3, rtol=1e-3))

    assert ok, "mismatch vs reference"
    print("KERNEL_OK")
</pallas_src>

<mosaic_0001>
module attributes {stable_mosaic.version = 11 : i64} {
  func.func @_fc_kernel(%arg0: i32, %arg1: i32, %arg2: i32, %arg3: memref<16x128xbf16, #tpu.memory_space<vmem>>, %arg4: memref<128x128xbf16, #tpu.memory_space<vmem>>, %arg5: memref<1x128xf32, #tpu.memory_space<vmem>>, %arg6: memref<1x128xf32, #tpu.memory_space<vmem>>, %arg7: memref<16x128xf32, #tpu.memory_space<vmem>>) attributes {dimension_semantics = [#tpu.dimension_semantics<parallel>, #tpu.dimension_semantics<parallel>, #tpu.dimension_semantics<arbitrary>], iteration_bounds = array<i64: 1, 1, 1>, scalar_prefetch = 0 : i64, scratch_operands = 0 : i64, tpu.core_type = #tpu.core_type<tc>, window_params = [{transform_indices = @transform_0, window_bounds = array<i64: 16, 128>}, {transform_indices = @transform_1, window_bounds = array<i64: 128, 128>}, {transform_indices = @transform_2, window_bounds = array<i64: 1, 128>}, {transform_indices = @transform_3, window_bounds = array<i64: 1, 128>}, {transform_indices = @transform_4, window_bounds = array<i64: 16, 128>}]} {
    %c0_i32 = arith.constant 0 : i32
    %0 = arith.cmpi eq, %arg2, %c0_i32 : i32
    %1 = arith.extui %0 : i1 to i32
    %c0_i32_0 = arith.constant 0 : i32
    %2 = arith.cmpi ne, %1, %c0_i32_0 : i32
    scf.if %2 {
      %cst_10 = arith.constant 0.000000e+00 : f32
      %12 = vector.broadcast %cst_10 : f32 to vector<16x128xf32>
      %c0_11 = arith.constant 0 : index
      %c0_12 = arith.constant 0 : index
      %13 = vector.load %arg7[%c0_11, %c0_12] : memref<16x128xf32, #tpu.memory_space<vmem>>, vector<16x128xf32>
      tpu.vector_store %arg7[%c0_11, %c0_12], %12 {strides = array<i32>} : memref<16x128xf32, #tpu.memory_space<vmem>>, vector<16x128xf32>,
    } else {
    }
    %c0 = arith.constant 0 : index
    %c0_1 = arith.constant 0 : index
    %3 = vector.load %arg7[%c0, %c0_1] : memref<16x128xf32, #tpu.memory_space<vmem>>, vector<16x128xf32>
    %c0_2 = arith.constant 0 : index
    %c0_3 = arith.constant 0 : index
    %4 = vector.load %arg3[%c0_2, %c0_3] : memref<16x128xbf16, #tpu.memory_space<vmem>>, vector<16x128xbf16>
    %c0_4 = arith.constant 0 : index
    %c0_5 = arith.constant 0 : index
    %5 = vector.load %arg4[%c0_4, %c0_5] : memref<128x128xbf16, #tpu.memory_space<vmem>>, vector<128x128xbf16>
    %cst = arith.constant dense<0.000000e+00> : vector<16x128xf32>
    %6 = tpu.matmul %4, %5, %cst {dimension_numbers = #tpu.dot_dimension_numbers<[1], [0], [0], [1], [0, 0, 1, 1], [], []>} : vector<16x128xbf16>, vector<128x128xbf16>, vector<16x128xf32> -> vector<16x128xf32>
    %7 = arith.addf %3, %6 : vector<16x128xf32>
    %c0_6 = arith.constant 0 : index
    %c0_7 = arith.constant 0 : index
    %8 = vector.load %arg7[%c0_6, %c0_7] : memref<16x128xf32, #tpu.memory_space<vmem>>, vector<16x128xf32>
    tpu.vector_store %arg7[%c0_6, %c0_7], %7 {strides = array<i32>} : memref<16x128xf32, #tpu.memory_space<vmem>>, vector<16x128xf32>,
    %c0_i32_8 = arith.constant 0 : i32
    %9 = arith.cmpi eq, %arg2, %c0_i32_8 : i32
    %10 = arith.extui %9 : i1 to i32
    %c0_i32_9 = arith.constant 0 : i32
    %11 = arith.cmpi ne, %10, %c0_i32_9 : i32
    scf.if %11 {
      %c0_10 = arith.constant 0 : index
      %c0_11 = arith.constant 0 : index
      %12 = vector.load %arg7[%c0_10, %c0_11] : memref<16x128xf32, #tpu.memory_space<vmem>>, vector<16x128xf32>
      %c0_12 = arith.constant 0 : index
      %c0_13 = arith.constant 0 : index
      %13 = vector.load %arg5[%c0_12, %c0_13] : memref<1x128xf32, #tpu.memory_space<vmem>>, vector<1x128xf32>
      %14 = vector.broadcast %13 : vector<1x128xf32> to vector<16x128xf32>
      %15 = arith.addf %12, %14 : vector<16x128xf32>
      %cst_14 = arith.constant 0.000000e+00 : f32
      %16 = vector.broadcast %cst_14 : f32 to vector<16x128xf32>
      %17 = arith.cmpf oge, %15, %16 : vector<16x128xf32>
      %c0_15 = arith.constant 0 : index
      %c0_16 = arith.constant 0 : index
      %18 = vector.load %arg6[%c0_15, %c0_16] : memref<1x128xf32, #tpu.memory_space<vmem>>, vector<1x128xf32>
      %19 = vector.broadcast %18 : vector<1x128xf32> to vector<16x128xf32>
      %20 = arith.mulf %15, %19 : vector<16x128xf32>
      %21 = arith.select %17, %15, %20 : vector<16x128xi1>, vector<16x128xf32>
      %c0_17 = arith.constant 0 : index
      %c0_18 = arith.constant 0 : index
      %22 = vector.load %arg7[%c0_17, %c0_18] : memref<16x128xf32, #tpu.memory_space<vmem>>, vector<16x128xf32>
      tpu.vector_store %arg7[%c0_17, %c0_18], %21 {strides = array<i32>} : memref<16x128xf32, #tpu.memory_space<vmem>>, vector<16x128xf32>,
    } else {
    }
    return
  }
  func.func @transform_0(%arg0: i32, %arg1: i32, %arg2: i32) -> (i32, i32) {
    %c0_i32 = arith.constant 0 : i32
    return %arg0, %arg2 : i32, i32
  }
  func.func @transform_1(%arg0: i32, %arg1: i32, %arg2: i32) -> (i32, i32) {
    %c0_i32 = arith.constant 0 : i32
    return %arg2, %arg1 : i32, i32
  }
  func.func @transform_2(%arg0: i32, %arg1: i32, %arg2: i32) -> (i32, i32) {
    %c0_i32 = arith.constant 0 : i32
    %c0_i32_0 = arith.constant 0 : i32
    return %c0_i32, %arg1 : i32, i32
  }
  func.func @transform_3(%arg0: i32, %arg1: i32, %arg2: i32) -> (i32, i32) {
    %c0_i32 = arith.constant 0 : i32
    %c0_i32_0 = arith.constant 0 : i32
    return %c0_i32, %arg1 : i32, i32
  }
  func.func @transform_4(%arg0: i32, %arg1: i32, %arg2: i32) -> (i32, i32) {
    %c0_i32 = arith.constant 0 : i32
    return %arg0, %arg1 : i32, i32
  }
}

</mosaic_0001>

<llo_original>
// kernel: _fc_pallas.1
$region0: #{_fc_pallas.1}
  #allocation0 [shape = 'u32[]', space=smem, size = 0x4, offset = 0x4, fixed_abs, tag = 'smem constant byte address 0x4 - core index']
  #allocation1 [shape = 'u32[144,128]{1,0:T(1,128)}', space=vmem, size = 0x12000, scoped, tag = 'internal scratch']
  %s0 = inlined_call_operand.hbm [shape: bf16[16,128], index: 0, kind: input, shape index: {}]
  %s1 = inlined_call_operand.hbm [shape: bf16[128,128], index: 1, kind: input, shape index: {}]
  %s2 = inlined_call_operand.vmem [shape: f32[1,128], index: 2, kind: input, shape index: {}]
  %s3 = inlined_call_operand.vmem [shape: f32[1,128], index: 3, kind: input, shape index: {}]
  %s4 = inlined_call_operand.hbm [shape: f32[16,128], index: 4, kind: output, shape index: {}]
  %s5 = sld [smem:[#allocation0]]
  $region42: #{_fc_pallas.1} parent=0
    _
  %s7 = ssub.s32 1, %s5
  %s8 = scalar_select 0, %s7, %s5
  $region1: #{_fc_pallas.1} parent=0
    #allocation2 [shape = 'u8[4096]{0}', space=vmem, size = 0x1000, scoped, tag = 'input window, operand 0, single buffered']
    #allocation3 [shape = 's32[1]{0}', space=sflag, size = 0x4, scoped, tag = 'scoped memory for _fc_pallas.1']
    #allocation4 [shape = 's32[1]{0}', space=sflag, size = 0x4, scoped, tag = 'scoped memory for _fc_pallas.1']
    #allocation5 [shape = 'u8[32768]{0}', space=vmem, size = 0x8000, scoped, tag = 'input window, operand 1, single buffered']
    #allocation6 [shape = 's32[1]{0}', space=sflag, size = 0x4, scoped, tag = 'scoped memory for _fc_pallas.1']
    #allocation7 [shape = 'u8[8192]{0}', space=vmem, size = 0x2000, scoped, tag = 'output window, operand 0, single buffered']
    %9 = vsyncpa [#allocation3], 0
    %10 = vsyncpa [#allocation6], 0
    %11 = vsyncpa [#allocation4], 0
    // Predicated region
    $region2: #{_fc_pallas.1} parent=1 // pred_check
      _
    $region3: #{_fc_pallas.1} parent=1 // pred_check_branch
      %13 = sbr.rel (0) target = $region5
    $region4: #{_fc_pallas.1} parent=1 // pred_region
      %s15 = ssub.s32 128, 128
      %16 = vsyncadd [#allocation3], %s15
      %s17 = sshll.u32 [#allocation2], 4
      %s18 = int_to_ptr.vmem [resolvable:$true] %s17
      %23 = dma.hbm_to_vmem [thread:$0]  %s0, 128, %s18, [#allocation3], 64, 64, 4
    $region5: #{_fc_pallas.1} parent=1 // pred_fallthru
      _
    // Predicated region
    $region6: #{_fc_pallas.1} parent=1 // pred_check
      _
    $region7: #{_fc_pallas.1} parent=1 // pred_check_branch
      %25 = sbr.rel (0) target = $region9
    $region8: #{_fc_pallas.1} parent=1 // pred_region
      %s27 = ssub.s32 1024, 1024
      %28 = vsyncadd [#allocation6], %s27
      %s29 = sshll.u32 [#allocation5], 4
      %s30 = int_to_ptr.vmem [resolvable:$true] %s29
      %35 = dma.hbm_to_vmem [thread:$0]  %s1, 1024, %s30, [#allocation6], 64, 64, 4
    $region9: #{_fc_pallas.1} parent=1 // pred_fallthru
      _
    // Predicated region
    $region10: #{_fc_pallas.1} parent=1 // pred_check
      _
    $region11: #{_fc_pallas.1} parent=1 // pred_check_branch
      %37 = sbr.rel (0) target = $region13
    $region12: #{_fc_pallas.1} parent=1 // pred_region
      _
    $region13: #{_fc_pallas.1} parent=1 // pred_fallthru
      _
    // Predicated region
    $region14: #{_fc_pallas.1} parent=1 // pred_check
      _
    $region15: #{_fc_pallas.1} parent=1 // pred_check_branch
      %39 = sbr.rel (0) target = $region17
    $region16: #{_fc_pallas.1} parent=1 // pred_region
      _
    $region17: #{_fc_pallas.1} parent=1 // pred_fallthru
      _
    // Predicated region
    $region18: #{_fc_pallas.1} parent=1 // pred_check
      _
    $region19: #{_fc_pallas.1} parent=1 // pred_check_branch
      %41 = sbr.rel (0) target = $region21
    $region20: #{_fc_pallas.1} parent=1 // pred_region
      %42 = dma.done [#allocation3], 128
    $region21: #{_fc_pallas.1} parent=1 // pred_fallthru
      _
    // Predicated region
    $region22: #{_fc_pallas.1} parent=1 // pred_check
      _
    $region23: #{_fc_pallas.1} parent=1 // pred_check_branch
      %44 = sbr.rel (0) target = $region25
    $region24: #{_fc_pallas.1} parent=1 // pred_region
      %45 = dma.done [#allocation6], 1024
    $region25: #{_fc_pallas.1} parent=1 // pred_fallthru
      _
    %p47 = scmp.eq.s32.totalorder 0, 0
    // Predicated region
    $region26: #{_fc_pallas.1} parent=1 // pred_check
      %p48 = pneg %p47
    $region27: #{_fc_pallas.1} parent=1 // pred_check_branch
      %50 = sbr.rel (%p48) target = $region29
    $region28: #{_fc_pallas.1} parent=1 // pred_region
      %51 = vst [vmem:[#allocation7] sm:$0xff] 0.0
      %52 = vst [vmem:[#allocation7 + $0x8] sm:$0xff] 0.0
    $region29: #{_fc_pallas.1} parent=1 // pred_fallthru
      _
    %v53 = vld [vmem:[#allocation7] sm:$0xff]
    %v54 = vld [vmem:[#allocation7 + $0x8] sm:$0xff]
    %v55 = vld [vmem:[#allocation2] sm:$0xf]
    %v56 = vld [vmem:[#allocation2 + $0x4] sm:$0xf]
    %v57 = vld [vmem:[#allocation5] sm:$0xf]
    %v58 = vld [vmem:[#allocation5 + $0x4] sm:$0xf]
    %v59 = vld [vmem:[#allocation5 + $0x8] sm:$0xf]
    %v60 = vld [vmem:[#allocation5 + $0xc] sm:$0xf]
    %v61 = vld [vmem:[#allocation5 + $0x10] sm:$0xf]
    %v62 = vld [vmem:[#allocation5 + $0x14] sm:$0xf]
    %v63 = vld [vmem:[#allocation5 + $0x18] sm:$0xf]
    %v64 = vld [vmem:[#allocation5 + $0x1c] sm:$0xf]
    %v65 = vld [vmem:[#allocation5 + $0x20] sm:$0xf]
    %v66 = vld [vmem:[#allocation5 + $0x24] sm:$0xf]
    %v67 = vld [vmem:[#allocation5 + $0x28] sm:$0xf]
    %v68 = vld [vmem:[#allocation5 + $0x2c] sm:$0xf]
    %v69 = vld [vmem:[#allocation5 + $0x30] sm:$0xf]
    %v70 = vld [vmem:[#allocation5 + $0x34] sm:$0xf]
    %v71 = vld [vmem:[#allocation5 + $0x38] sm:$0xf]
    %v72 = vld [vmem:[#allocation5 + $0x3c] sm:$0xf]
    %v75 = vunpack.c.l.b16 %v55
    %v76 = vunpack.c.l.b16 %v56
    %v77 = vpack.c.b16 %v76, %v75
    %v95 = vunpack.c.l.b16 %v57
    %v96 = vunpack.c.l.b16 %v58
    %v97 = vunpack.c.l.b16 %v59
    %v98 = vunpack.c.l.b16 %v60
    %v99 = vunpack.c.l.b16 %v61
    %v100 = vunpack.c.l.b16 %v62
    %v101 = vunpack.c.l.b16 %v63
    %v102 = vunpack.c.l.b16 %v64
    %v103 = vunpack.c.l.b16 %v65
    %v104 = vunpack.c.l.b16 %v66
    %v105 = vunpack.c.l.b16 %v67
    %v106 = vunpack.c.l.b16 %v68
    %v107 = vunpack.c.l.b16 %v69
    %v108 = vunpack.c.l.b16 %v70
    %v109 = vunpack.c.l.b16 %v71
    %v110 = vunpack.c.l.b16 %v72
    %v111 = vpack.c.b16 %v96, %v95
    %v112 = vpack.c.b16 %v98, %v97
    %v113 = vpack.c.b16 %v100, %v99
    %v114 = vpack.c.b16 %v102, %v101
    %v115 = vpack.c.b16 %v104, %v103
    %v116 = vpack.c.b16 %v106, %v105
    %v117 = vpack.c.b16 %v108, %v107
    %v118 = vpack.c.b16 %v110, %v109
    %127 = vmatprep.subr.bf16.mxu0 0
    %128 = vmatpush1.bf16.msra.mxu0 %v118
    %129 = vmatprep.subr.bf16.mxu0 0
    %130 = vmatpush1.bf16.msra.mxu0 %v117
    %131 = vmatprep.subr.bf16.mxu0 0
    %132 = vmatpush1.bf16.msra.mxu0 %v116
    %133 = vmatprep.subr.bf16.mxu0 0
    %134 = vmatpush1.bf16.msra.mxu0 %v115
    %135 = vmatprep.subr.bf16.mxu0 0
    %136 = vmatpush1.bf16.msra.mxu0 %v114
    %137 = vmatprep.subr.bf16.mxu0 0
    %138 = vmatpush1.bf16.msra.mxu0 %v113
    %139 = vmatprep.subr.bf16.mxu0 0
    %140 = vmatpush1.bf16.msra.mxu0 %v112
    %141 = vmatprep.subr.bf16.mxu0 0
    %142 = vmatpush1.bf16.msra.mxu0 %v111
    %143 = vmatprep.subr.bf16.mxu0 0
    %144 = vmatpush2.bf16.msra.mxu0 0
    %145 = vmatprep.subr.bf16.mxu0 0
    %146 = vmatpush2.bf16.msra.mxu0 0
    %147 = vmatprep.subr.bf16.mxu0 0
    %148 = vmatpush2.bf16.msra.mxu0 0
    %149 = vmatprep.subr.bf16.mxu0 0
    %150 = vmatpush2.bf16.msra.mxu0 0
    %151 = vmatprep.subr.bf16.mxu0 0
    %152 = vmatpush2.bf16.msra.mxu0 0
    %153 = vmatprep.subr.bf16.mxu0 0
    %154 = vmatpush2.bf16.msra.mxu0 0
    %155 = vmatprep.subr.bf16.mxu0 0
    %156 = vmatpush2.bf16.msra.mxu0 0
    %157 = vmatprep.subr.bf16.mxu0 0
    %158 = vmatpush2.bf16.msra.mxu0 0
    %159 = vmatprep.mubr.bf16.mxu0 0
    %160 = vmatmul.mubr.bf16.gmra.mxu0 %v77
    %v161 = vpop.f32.mrf.mxu0
    %v162 = vadd.f32 0.0, %v161
    %v163 = vpop.f32.mrf.mxu0
    %v164 = vpop.f32.mrf.mxu0
    %v165 = vadd.f32 0.0, %v164
    %v166 = vpop.f32.mrf.mxu0
    %167 = vdwg.mxu0
    %v168 = vadd.f32 %v53, %v162
    %v169 = vadd.f32 %v54, %v165
    %170 = vst [vmem:[#allocation7] sm:$0xff] %v168
    %171 = vst [vmem:[#allocation7 + $0x8] sm:$0xff] %v169
    // Predicated region
    $region30: #{_fc_pallas.1} parent=1 // pred_check
      %p172 = pneg %p47
    $region31: #{_fc_pallas.1} parent=1 // pred_check_branch
      %174 = sbr.rel (%p172) target = $region33
    $region32: #{_fc_pallas.1} parent=1 // pred_region
      %v175 = vld [vmem:[#allocation7] sm:$0xff]
      %v176 = vld [vmem:[#allocation7 + $0x8] sm:$0xff]
      %v177 = vld [vmem:[%s2] sm:$0x1]
      %v179 = vlaneseq
      %v180 = vshrl.u32 %v179, 7
      %v181 = vsub.s32 0, %v180
      %v182 = vrot.slane %v177, %v181
      %v184 = vadd.f32 %v175, %v182
      %v185 = vadd.f32 %v176, %v182
      %vm186 = vcmp.ge.f32.partialorder %v184, 0.0
      %vm187 = vcmp.ge.f32.partialorder %v185, 0.0
      %v188 = vld [vmem:[%s3] sm:$0x1]
      %v190 = vlaneseq
      %v191 = vshrl.u32 %v190, 7
      %v192 = vsub.s32 0, %v191
      %v193 = vrot.slane %v188, %v192
      %v195 = vmul.f32 %v184, %v193
      %v196 = vmul.f32 %v185, %v193
      %v197 = vsel %vm186, %v184, %v195
      %v198 = vsel %vm187, %v185, %v196
      %199 = vst [vmem:[#allocation7] sm:$0xff] %v197
      %200 = vst [vmem:[#allocation7 + $0x8] sm:$0xff] %v198
    $region33: #{_fc_pallas.1} parent=1 // pred_fallthru
      _
    // Predicated region
    $region34: #{_fc_pallas.1} parent=1 // pred_check
      _
    $region35: #{_fc_pallas.1} parent=1 // pred_check_branch
      %202 = sbr.rel (0) target = $region37
    $region36: #{_fc_pallas.1} parent=1 // pred_region
      %s204 = ssub.s32 256, 256
      %205 = vsyncadd [#allocation4], %s204
      %s206 = sshll.u32 [#allocation7], 4
      %s207 = int_to_ptr.vmem [resolvable:$true] %s206
      %212 = dma.vmem_to_hbm [thread:$0]  %s207, 256, %s4, [#allocation4], 128, 128, 8
    $region37: #{_fc_pallas.1} parent=1 // pred_fallthru
      _
    // Predicated region
    $region38: #{_fc_pallas.1} parent=1 // pred_check
      _
    $region39: #{_fc_pallas.1} parent=1 // pred_check_branch
      %214 = sbr.rel (0) target = $region41
    $region40: #{_fc_pallas.1} parent=1 // pred_region
      %215 = dma.done [#allocation4], 256
    $region41: #{_fc_pallas.1} parent=1 // pred_fallthru
      _
    %216 = vsyncpa [#allocation3], 1
    %217 = vsyncpa [#allocation6], 1
    %218 = vsyncpa [#allocation4], 1

</llo_original>
